<compile_context>
chip_gen: v7x
topology: tpu7x:2x2x1
jax: 0.10.0
libtpu: 0.0.40
codegen_flags: <defaults>
</compile_context>

<pallas_src>
import functools

import jax
import jax.numpy as jnp
from jax.experimental import pallas as pl
from jax.experimental.pallas import tpu as pltpu


# ---------------------------------------------------------------------------
# Kernel: one lane-tile (Cp, B*HW) per grid step; two fused im2col convs.
# ---------------------------------------------------------------------------
def _resblock_kernel(x_ref, w_ref, b_ref, o_ref, *, H, W, Cp, scale):
    HW = H * W
    Lb = x_ref.shape[1]                 # B*HW lanes in this block
    X = x_ref[...]                      # (Cp, Lb) f32, lane-dense
    w2 = w_ref[...]                     # (Cp, 9*Cp) im2col weight, one tile
    bias = jnp.broadcast_to(b_ref[...], (Cp, Lb))   # hoisted, reused by both convs

    # Per-lane pixel coordinates (p % HW handles multiple images per block).
    p = jax.lax.broadcasted_iota(jnp.int32, (1, Lb), 1)
    if HW & (HW - 1) == 0:
        q = jnp.bitwise_and(p, HW - 1)
    else:
        q = jax.lax.rem(p, HW)
    if W & (W - 1) == 0:
        pw = jnp.bitwise_and(q, W - 1)
    else:
        pw = jax.lax.rem(q, W)

    # Base edge comparisons computed once; AND-ed per tap (shared by both convs).
    top_ok = q >= W                 # h - 1 >= 0
    bot_ok = q < HW - W             # h + 1 <= H - 1
    left_ok = pw >= 1               # w - 1 >= 0
    right_ok = pw <= W - 2          # w + 1 <= W - 1

    masks = []
    for t in range(9):
        ky, kx = divmod(t, 3)
        m = None
        if ky == 0:
            m = top_ok
        elif ky == 2:
            m = bot_ok
        if kx == 0:
            m = left_ok if m is None else (m & left_ok)
        elif kx == 2:
            m = right_ok if m is None else (m & right_ok)
        masks.append(m)

    def conv3x3(v):
        # Build the stacked im2col block (9*Cp, Lb): tap t occupies sublane
        # rows [t*Cp, (t+1)*Cp) with the lane-shifted, edge-masked activation.
        slabs = []
        for t in range(9):
            ky, kx = divmod(t, 3)
            s = (ky - 1) * W + (kx - 1)          # result[:, p] = v[:, p + s]
            blk = v if s == 0 else pltpu.roll(v, (-s) % Lb, axis=1)
            if masks[t] is not None:
                blk = jnp.where(masks[t], blk, 0.0)
            slabs.append(blk)
        stacked = jnp.concatenate(slabs, axis=0)  # (9*Cp, Lb)
        # Single MXU matmul, K = 9*Cp (=144 for C=10); bias folded in once.
        return jnp.dot(w2, stacked, preferred_element_type=jnp.float32) + bias

    y = jnp.maximum(conv3x3(X), 0.0)              # conv -> ReLU
    y = conv3x3(y)                                # same conv (shared weights)
    o_ref[...] = (y * scale + X).astype(o_ref.dtype)   # lane-dense store


# ---------------------------------------------------------------------------
# Wrapper: PyTorch-compatible NCHW in / NCHW out.
# ---------------------------------------------------------------------------
def resblock_forward(x_nchw, w_oihw, bias, scale=0.1):
    N, C, H, W = x_nchw.shape
    HW = H * W
    Cp = ((C + 7) // 8) * 8          # channel rows padded to a sublane multiple
    dtype = x_nchw.dtype

    # Images per grid step: aim for a wide lane dim, but keep >= 2 grid steps
    # when N >= 2 so both v7x TensorCores get work (harmless on v5e/v6e).
    lane_target = 2048
    b_cap = max(1, lane_target // HW)
    if N <= 1:
        B = 1
    else:
        B = max(1, min(b_cap, (N + 1) // 2))
    G = -(-N // B)                   # number of grid steps
    N_pad = G * B
    Lb = B * HW

    # Activations: channel-major 2-D slab (Cp, N_pad*HW); lane p = image*HW + pixel.
    x_cm = jnp.transpose(x_nchw.reshape(N, C, HW), (1, 0, 2)).reshape(C, N * HW)
    xg = jnp.zeros((Cp, N_pad * HW), dtype).at[:C, : N * HW].set(x_cm)

    # Weights: single lane-dense im2col matrix w2[o, t*Cp + i] = w[o, i, ky, kx].
    w_t = jnp.transpose(w_oihw, (2, 3, 0, 1)).reshape(9, C, C)       # (tap, o, i)
    w_pad = jnp.zeros((9, Cp, Cp), dtype).at[:, :C, :C].set(w_t)
    w2 = jnp.transpose(w_pad, (1, 0, 2)).reshape(Cp, 9 * Cp)

    b_pad = jnp.zeros((Cp, 1), dtype).at[:C, 0].set(bias)

    kernel = functools.partial(
        _resblock_kernel, H=H, W=W, Cp=Cp, scale=float(scale))

    out = pl.pallas_call(
        kernel,
        out_shape=jax.ShapeDtypeStruct((Cp, N_pad * HW), dtype),
        grid_spec=pltpu.PrefetchScalarGridSpec(
            num_scalar_prefetch=0,
            grid=(G,),
            in_specs=[
                pl.BlockSpec((Cp, Lb), lambda n: (0, n)),        # activations
                pl.BlockSpec((Cp, 9 * Cp), lambda n: (0, 0)),    # im2col weight
                pl.BlockSpec((Cp, 1), lambda n: (0, 0)),         # bias
            ],
            out_specs=pl.BlockSpec((Cp, Lb), lambda n: (0, n)),
        ),
        compiler_params=pltpu.CompilerParams(
            dimension_semantics=("parallel",)),   # v7x: shard steps over 2 TCs
    )(xg, w2, b_pad)

    out = out[:C, : N * HW].reshape(C, N, HW)
    return jnp.transpose(out, (1, 0, 2)).reshape(N, C, H, W)


# ---------------------------------------------------------------------------
# Pure-JAX reference (mirrors the PyTorch module) for correctness check.
# ---------------------------------------------------------------------------
def _reference_forward(x_nchw, w_oihw, bias, scale=0.1):
    def conv(v):
        y = jax.lax.conv_general_dilated(
            v, w_oihw, window_strides=(1, 1), padding=((1, 1), (1, 1)),
            dimension_numbers=("NCHW", "OIHW", "NCHW"),
            precision=jax.lax.Precision.HIGHEST)
        return y + bias[None, :, None, None]

    t = conv(x_nchw)
    t = jnp.maximum(t, 0.0)
    t = conv(t)
    return t * scale + x_nchw


if __name__ == "__main__":
    key = jax.random.PRNGKey(0)
    k_x, k_w, k_b = jax.random.split(key, 3)

    N, C, H, W = 2, 10, 16, 16   # Conv2d(10, 10, 3, 1, 1) => 10 channels
    x = jax.random.normal(k_x, (N, C, H, W), dtype=jnp.float32)
    w_oihw = 0.1 * jax.random.normal(k_w, (C, C, 3, 3), dtype=jnp.float32)
    bias = 0.1 * jax.random.normal(k_b, (C,), dtype=jnp.float32)

    out = resblock_forward(x, w_oihw, bias, scale=0.1)
    out = jax.block_until_ready(out)

    ref = jax.block_until_ready(_reference_forward(x, w_oihw, bias, scale=0.1))
    assert out.shape == (N, C, H, W)
    assert jnp.allclose(out, ref, atol=5e-4, rtol=5e-4), "mismatch vs reference"

    print("KERNEL_OK")
</pallas_src>

<mosaic_0001>
module attributes {stable_mosaic.version = 11 : i64} {
  func.func @_resblock_kernel(%arg0: i32, %arg1: memref<16x256xf32, #tpu.memory_space<vmem>>, %arg2: memref<16x144xf32, #tpu.memory_space<vmem>>, %arg3: memref<16x1xf32, #tpu.memory_space<vmem>>, %arg4: memref<16x256xf32, #tpu.memory_space<vmem>>) attributes {dimension_semantics = [#tpu.dimension_semantics<parallel>], iteration_bounds = array<i64: 2>, scalar_prefetch = 0 : i64, scratch_operands = 0 : i64, tpu.core_type = #tpu.core_type<tc>, window_params = [{transform_indices = @transform_0, window_bounds = array<i64: 16, 256>}, {pipeline_mode = #tpu.pipeline_mode<synchronous>, transform_indices = @transform_1, window_bounds = array<i64: 16, 144>}, {pipeline_mode = #tpu.pipeline_mode<synchronous>, transform_indices = @transform_2, window_bounds = array<i64: 16, 1>}, {transform_indices = @transform_3, window_bounds = array<i64: 16, 256>}]} {
    %c0 = arith.constant 0 : index
    %c0_0 = arith.constant 0 : index
    %0 = vector.load %arg1[%c0, %c0_0] : memref<16x256xf32, #tpu.memory_space<vmem>>, vector<16x256xf32>
    %c0_1 = arith.constant 0 : index
    %c0_2 = arith.constant 0 : index
    %1 = vector.load %arg2[%c0_1, %c0_2] : memref<16x144xf32, #tpu.memory_space<vmem>>, vector<16x144xf32>
    %c0_3 = arith.constant 0 : index
    %c0_4 = arith.constant 0 : index
    %2 = vector.load %arg3[%c0_3, %c0_4] : memref<16x1xf32, #tpu.memory_space<vmem>>, vector<16x1xf32>
    %3 = vector.shape_cast %2 : vector<16x1xf32> to vector<16x1xf32>
    %4 = vector.broadcast %3 : vector<16x1xf32> to vector<16x256xf32>
    %5 = tpu.iota {dimensions = array<i32: 1>} : vector<1x256xi32>
    %c255_i32 = arith.constant 255 : i32
    %6 = vector.broadcast %c255_i32 : i32 to vector<1x256xi32>
    %7 = arith.andi %5, %6 : vector<1x256xi32>
    %c15_i32 = arith.constant 15 : i32
    %8 = vector.broadcast %c15_i32 : i32 to vector<1x256xi32>
    %9 = arith.andi %7, %8 : vector<1x256xi32>
    %c16_i32 = arith.constant 16 : i32
    %10 = vector.broadcast %c16_i32 : i32 to vector<1x256xi32>
    %11 = arith.cmpi sge, %7, %10 : vector<1x256xi32>
    %c240_i32 = arith.constant 240 : i32
    %12 = vector.broadcast %c240_i32 : i32 to vector<1x256xi32>
    %13 = arith.cmpi slt, %7, %12 : vector<1x256xi32>
    %c1_i32 = arith.constant 1 : i32
    %14 = vector.broadcast %c1_i32 : i32 to vector<1x256xi32>
    %15 = arith.cmpi sge, %9, %14 : vector<1x256xi32>
    %c14_i32 = arith.constant 14 : i32
    %16 = vector.broadcast %c14_i32 : i32 to vector<1x256xi32>
    %17 = arith.cmpi sle, %9, %16 : vector<1x256xi32>
    %18 = arith.andi %11, %15 : vector<1x256xi1>
    %19 = arith.andi %11, %17 : vector<1x256xi1>
    %20 = arith.andi %13, %15 : vector<1x256xi1>
    %21 = arith.andi %13, %17 : vector<1x256xi1>
    %c17_i32 = arith.constant 17 : i32
    %22 = tpu.dynamic_rotate %0 by %c17_i32 dim 1 : vector<16x256xf32>, i32 -> vector<16x256xf32>
    %cst = arith.constant 0.000000e+00 : f32
    %23 = vector.shape_cast %18 : vector<1x256xi1> to vector<1x256xi1>
    %24 = vector.broadcast %23 : vector<1x256xi1> to vector<16x256xi1>
    %25 = vector.broadcast %cst : f32 to vector<16x256xf32>
    %26 = arith.select %24, %22, %25 : vector<16x256xi1>, vector<16x256xf32>
    %c16_i32_5 = arith.constant 16 : i32
    %27 = tpu.dynamic_rotate %0 by %c16_i32_5 dim 1 : vector<16x256xf32>, i32 -> vector<16x256xf32>
    %cst_6 = arith.constant 0.000000e+00 : f32
    %28 = vector.shape_cast %11 : vector<1x256xi1> to vector<1x256xi1>
    %29 = vector.broadcast %28 : vector<1x256xi1> to vector<16x256xi1>
    %30 = vector.broadcast %cst_6 : f32 to vector<16x256xf32>
    %31 = arith.select %29, %27, %30 : vector<16x256xi1>, vector<16x256xf32>
    %c15_i32_7 = arith.constant 15 : i32
    %32 = tpu.dynamic_rotate %0 by %c15_i32_7 dim 1 : vector<16x256xf32>, i32 -> vector<16x256xf32>
    %cst_8 = arith.constant 0.000000e+00 : f32
    %33 = vector.shape_cast %19 : vector<1x256xi1> to vector<1x256xi1>
    %34 = vector.broadcast %33 : vector<1x256xi1> to vector<16x256xi1>
    %35 = vector.broadcast %cst_8 : f32 to vector<16x256xf32>
    %36 = arith.select %34, %32, %35 : vector<16x256xi1>, vector<16x256xf32>
    %c1_i32_9 = arith.constant 1 : i32
    %37 = tpu.dynamic_rotate %0 by %c1_i32_9 dim 1 : vector<16x256xf32>, i32 -> vector<16x256xf32>
    %cst_10 = arith.constant 0.000000e+00 : f32
    %38 = vector.shape_cast %15 : vector<1x256xi1> to vector<1x256xi1>
    %39 = vector.broadcast %38 : vector<1x256xi1> to vector<16x256xi1>
    %40 = vector.broadcast %cst_10 : f32 to vector<16x256xf32>
    %41 = arith.select %39, %37, %40 : vector<16x256xi1>, vector<16x256xf32>
    %c255_i32_11 = arith.constant 255 : i32
    %42 = tpu.dynamic_rotate %0 by %c255_i32_11 dim 1 : vector<16x256xf32>, i32 -> vector<16x256xf32>
    %cst_12 = arith.constant 0.000000e+00 : f32
    %43 = vector.shape_cast %17 : vector<1x256xi1> to vector<1x256xi1>
    %44 = vector.broadcast %43 : vector<1x256xi1> to vector<16x256xi1>
    %45 = vector.broadcast %cst_12 : f32 to vector<16x256xf32>
    %46 = arith.select %44, %42, %45 : vector<16x256xi1>, vector<16x256xf32>
    %c241_i32 = arith.constant 241 : i32
    %47 = tpu.dynamic_rotate %0 by %c241_i32 dim 1 : vector<16x256xf32>, i32 -> vector<16x256xf32>
    %cst_13 = arith.constant 0.000000e+00 : f32
    %48 = vector.shape_cast %20 : vector<1x256xi1> to vector<1x256xi1>
    %49 = vector.broadcast %48 : vector<1x256xi1> to vector<16x256xi1>
    %50 = vector.broadcast %cst_13 : f32 to vector<16x256xf32>
    %51 = arith.select %49, %47, %50 : vector<16x256xi1>, vector<16x256xf32>
    %c240_i32_14 = arith.constant 240 : i32
    %52 = tpu.dynamic_rotate %0 by %c240_i32_14 dim 1 : vector<16x256xf32>, i32 -> vector<16x256xf32>
    %cst_15 = arith.constant 0.000000e+00 : f32
    %53 = vector.shape_cast %13 : vector<1x256xi1> to vector<1x256xi1>
    %54 = vector.broadcast %53 : vector<1x256xi1> to vector<16x256xi1>
    %55 = vector.broadcast %cst_15 : f32 to vector<16x256xf32>
    %56 = arith.select %54, %52, %55 : vector<16x256xi1>, vector<16x256xf32>
    %c239_i32 = arith.constant 239 : i32
    %57 = tpu.dynamic_rotate %0 by %c239_i32 dim 1 : vector<16x256xf32>, i32 -> vector<16x256xf32>
    %cst_16 = arith.constant 0.000000e+00 : f32
    %58 = vector.shape_cast %21 : vector<1x256xi1> to vector<1x256xi1>
    %59 = vector.broadcast %58 : vector<1x256xi1> to vector<16x256xi1>
    %60 = vector.broadcast %cst_16 : f32 to vector<16x256xf32>
    %61 = arith.select %59, %57, %60 : vector<16x256xi1>, vector<16x256xf32>
    %62 = tpu.concatenate %26, %31, %36, %41, %0, %46, %51, %56, %61 in 0 : vector<16x256xf32>, vector<16x256xf32>, vector<16x256xf32>, vector<16x256xf32>, vector<16x256xf32>, vector<16x256xf32>, vector<16x256xf32>, vector<16x256xf32>, vector<16x256xf32> -> vector<144x256xf32>
    %cst_17 = arith.constant dense<0.000000e+00> : vector<16x256xf32>
    %63 = tpu.matmul %1, %62, %cst_17 {dimension_numbers = #tpu.dot_dimension_numbers<[1], [0], [0], [1], [0, 0, 1, 1], [], []>} : vector<16x144xf32>, vector<144x256xf32>, vector<16x256xf32> -> vector<16x256xf32>
    %64 = arith.addf %63, %4 : vector<16x256xf32>
    %cst_18 = arith.constant 0.000000e+00 : f32
    %65 = vector.broadcast %cst_18 : f32 to vector<16x256xf32>
    %66 = arith.maximumf %64, %65 : vector<16x256xf32>
    %c17_i32_19 = arith.constant 17 : i32
    %67 = tpu.dynamic_rotate %66 by %c17_i32_19 dim 1 : vector<16x256xf32>, i32 -> vector<16x256xf32>
    %cst_20 = arith.constant 0.000000e+00 : f32
    %68 = vector.shape_cast %18 : vector<1x256xi1> to vector<1x256xi1>
    %69 = vector.broadcast %68 : vector<1x256xi1> to vector<16x256xi1>
    %70 = vector.broadcast %cst_20 : f32 to vector<16x256xf32>
    %71 = arith.select %69, %67, %70 : vector<16x256xi1>, vector<16x256xf32>
    %c16_i32_21 = arith.constant 16 : i32
    %72 = tpu.dynamic_rotate %66 by %c16_i32_21 dim 1 : vector<16x256xf32>, i32 -> vector<16x256xf32>
    %cst_22 = arith.constant 0.000000e+00 : f32
    %73 = vector.shape_cast %11 : vector<1x256xi1> to vector<1x256xi1>
    %74 = vector.broadcast %73 : vector<1x256xi1> to vector<16x256xi1>
    %75 = vector.broadcast %cst_22 : f32 to vector<16x256xf32>
    %76 = arith.select %74, %72, %75 : vector<16x256xi1>, vector<16x256xf32>
    %c15_i32_23 = arith.constant 15 : i32
    %77 = tpu.dynamic_rotate %66 by %c15_i32_23 dim 1 : vector<16x256xf32>, i32 -> vector<16x256xf32>
    %cst_24 = arith.constant 0.000000e+00 : f32
    %78 = vector.shape_cast %19 : vector<1x256xi1> to vector<1x256xi1>
    %79 = vector.broadcast %78 : vector<1x256xi1> to vector<16x256xi1>
    %80 = vector.broadcast %cst_24 : f32 to vector<16x256xf32>
    %81 = arith.select %79, %77, %80 : vector<16x256xi1>, vector<16x256xf32>
    %c1_i32_25 = arith.constant 1 : i32
    %82 = tpu.dynamic_rotate %66 by %c1_i32_25 dim 1 : vector<16x256xf32>, i32 -> vector<16x256xf32>
    %cst_26 = arith.constant 0.000000e+00 : f32
    %83 = vector.shape_cast %15 : vector<1x256xi1> to vector<1x256xi1>
    %84 = vector.broadcast %83 : vector<1x256xi1> to vector<16x256xi1>
    %85 = vector.broadcast %cst_26 : f32 to vector<16x256xf32>
    %86 = arith.select %84, %82, %85 : vector<16x256xi1>, vector<16x256xf32>
    %c255_i32_27 = arith.constant 255 : i32
    %87 = tpu.dynamic_rotate %66 by %c255_i32_27 dim 1 : vector<16x256xf32>, i32 -> vector<16x256xf32>
    %cst_28 = arith.constant 0.000000e+00 : f32
    %88 = vector.shape_cast %17 : vector<1x256xi1> to vector<1x256xi1>
    %89 = vector.broadcast %88 : vector<1x256xi1> to vector<16x256xi1>
    %90 = vector.broadcast %cst_28 : f32 to vector<16x256xf32>
    %91 = arith.select %89, %87, %90 : vector<16x256xi1>, vector<16x256xf32>
    %c241_i32_29 = arith.constant 241 : i32
    %92 = tpu.dynamic_rotate %66 by %c241_i32_29 dim 1 : vector<16x256xf32>, i32 -> vector<16x256xf32>
    %cst_30 = arith.constant 0.000000e+00 : f32
    %93 = vector.shape_cast %20 : vector<1x256xi1> to vector<1x256xi1>
    %94 = vector.broadcast %93 : vector<1x256xi1> to vector<16x256xi1>
    %95 = vector.broadcast %cst_30 : f32 to vector<16x256xf32>
    %96 = arith.select %94, %92, %95 : vector<16x256xi1>, vector<16x256xf32>
    %c240_i32_31 = arith.constant 240 : i32
    %97 = tpu.dynamic_rotate %66 by %c240_i32_31 dim 1 : vector<16x256xf32>, i32 -> vector<16x256xf32>
    %cst_32 = arith.constant 0.000000e+00 : f32
    %98 = vector.shape_cast %13 : vector<1x256xi1> to vector<1x256xi1>
    %99 = vector.broadcast %98 : vector<1x256xi1> to vector<16x256xi1>
    %100 = vector.broadcast %cst_32 : f32 to vector<16x256xf32>
    %101 = arith.select %99, %97, %100 : vector<16x256xi1>, vector<16x256xf32>
    %c239_i32_33 = arith.constant 239 : i32
    %102 = tpu.dynamic_rotate %66 by %c239_i32_33 dim 1 : vector<16x256xf32>, i32 -> vector<16x256xf32>
    %cst_34 = arith.constant 0.000000e+00 : f32
    %103 = vector.shape_cast %21 : vector<1x256xi1> to vector<1x256xi1>
    %104 = vector.broadcast %103 : vector<1x256xi1> to vector<16x256xi1>
    %105 = vector.broadcast %cst_34 : f32 to vector<16x256xf32>
    %106 = arith.select %104, %102, %105 : vector<16x256xi1>, vector<16x256xf32>
    %107 = tpu.concatenate %71, %76, %81, %86, %66, %91, %96, %101, %106 in 0 : vector<16x256xf32>, vector<16x256xf32>, vector<16x256xf32>, vector<16x256xf32>, vector<16x256xf32>, vector<16x256xf32>, vector<16x256xf32>, vector<16x256xf32>, vector<16x256xf32> -> vector<144x256xf32>
    %cst_35 = arith.constant dense<0.000000e+00> : vector<16x256xf32>
    %108 = tpu.matmul %1, %107, %cst_35 {dimension_numbers = #tpu.dot_dimension_numbers<[1], [0], [0], [1], [0, 0, 1, 1], [], []>} : vector<16x144xf32>, vector<144x256xf32>, vector<16x256xf32> -> vector<16x256xf32>
    %109 = arith.addf %108, %4 : vector<16x256xf32>
    %cst_36 = arith.constant 1.000000e-01 : f32
    %110 = vector.broadcast %cst_36 : f32 to vector<16x256xf32>
    %111 = arith.mulf %109, %110 : vector<16x256xf32>
    %112 = arith.addf %111, %0 : vector<16x256xf32>
    %c0_37 = arith.constant 0 : index
    %c0_38 = arith.constant 0 : index
    %113 = vector.load %arg4[%c0_37, %c0_38] : memref<16x256xf32, #tpu.memory_space<vmem>>, vector<16x256xf32>
    tpu.vector_store %arg4[%c0_37, %c0_38], %112 {strides = array<i32>} : memref<16x256xf32, #tpu.memory_space<vmem>>, vector<16x256xf32>,
    return
  }
  func.func @transform_0(%arg0: i32) -> (i32, i32) {
    %c0_i32 = arith.constant 0 : i32
    %c0_i32_0 = arith.constant 0 : i32
    return %c0_i32, %arg0 : i32, i32
  }
  func.func @transform_1(%arg0: i32) -> (i32, i32) {
    %c0_i32 = arith.constant 0 : i32
    %c0_i32_0 = arith.constant 0 : i32
    %c0_i32_1 = arith.constant 0 : i32
    return %c0_i32, %c0_i32_0 : i32, i32
  }
  func.func @transform_2(%arg0: i32) -> (i32, i32) {
    %c0_i32 = arith.constant 0 : i32
    %c0_i32_0 = arith.constant 0 : i32
    %c0_i32_1 = arith.constant 0 : i32
    return %c0_i32, %c0_i32_0 : i32, i32
  }
  func.func @transform_3(%arg0: i32) -> (i32, i32) {
    %c0_i32 = arith.constant 0 : i32
    %c0_i32_0 = arith.constant 0 : i32
    return %c0_i32, %arg0 : i32, i32
  }
}

</mosaic_0001>

<llo_original>
// kernel: tpu_custom_call.1
$region0: #{tpu_custom_call.1}
  #allocation0 [shape = 'u32[]', space=smem, size = 0x4, offset = 0x4, fixed_abs, tag = 'smem constant byte address 0x4 - core index']
  #allocation1 [shape = 'u32[144,128]{1,0:T(1,128)}', space=vmem, size = 0x12000, scoped, tag = 'internal scratch']
  %s0 = inlined_call_operand.hbm [shape: f32[16,512], index: 0, kind: input, shape index: {}]
  %s1 = inlined_call_operand.hbm [shape: f32[16,144], index: 1, kind: input, shape index: {}]
  %s2 = inlined_call_operand.vmem [shape: f32[16,1], index: 2, kind: input, shape index: {}]
  %s3 = inlined_call_operand.hbm [shape: f32[16,512], index: 3, kind: output, shape index: {}]
  %s4 = sld [smem:[#allocation0]]
  $region53: #{tpu_custom_call.1} parent=0
    _
  %s6 = ssub.s32 1, %s4
  %s7 = scalar_select 0, %s6, %s4
  $region1: #{tpu_custom_call.1} parent=0
    #allocation2 [shape = 'u8[32768]{0}', space=vmem, size = 0x8000, scoped, tag = 'input window, operand 0']
    #allocation3 [shape = 's32[2]{0}', space=sflag, size = 0x8, scoped, tag = 'scoped memory for tpu_custom_call.1']
    #allocation4 [shape = 's32[2]{0}', space=sflag, size = 0x8, scoped, tag = 'scoped memory for tpu_custom_call.1']
    #allocation5 [shape = 'u8[16384]{0}', space=vmem, size = 0x4000, scoped, tag = 'input window, operand 1, single buffered']
    #allocation6 [shape = 's32[1]{0}', space=sflag, size = 0x4, scoped, tag = 'scoped memory for tpu_custom_call.1']
    #allocation7 [shape = 'u8[32768]{0}', space=vmem, size = 0x8000, scoped, tag = 'output window, operand 0']
    %8 = vsyncpa [#allocation3], 0
    %s9 = scalar_lea.sflag [#allocation3], 1
    %10 = vsyncpa %s9, 0
    %11 = vsyncpa [#allocation6], 0
    %12 = vsyncpa [#allocation4], 0
    %s13 = scalar_lea.sflag [#allocation4], 1
    %14 = vsyncpa %s13, 0
    loop: start=0, step=1, limit=4
    $region2: #{tpu_custom_call.1} parent=1 // loop_pre_header
      _
    $region3: #{tpu_custom_call.1} parent=1 // loop_header
      %s16 = sphi 0, %s20
      %p17 = scmp.ge.s32.totalorder %s16, 4
      %s26 = sphi 0, %s28
      %s29 = sphi 0, %s26
      %s30 = sphi 0, %s29
      %s46 = sphi 0, %s30
      %s50 = sphi 0, %s50
      %s52 = sphi 0, %s50
      %s53 = sphi 0, %s52
      %s67 = sphi 0, %s53
      %s71 = sphi 0, %s71
      %s73 = sphi 0, %s71
      %s74 = sphi 0, %s73
      %s88 = sphi 0, %s74
      %s94 = sphi 0, %s96
      %s97 = sphi 0, %s94
      %s98 = sphi 0, %s97
      %s114 = sphi 0, %s98
    $region4: #{tpu_custom_call.1} parent=1 // loop_header_branch
      %19 = sbr.rel (%p17) target = $region8
    $region5: #{tpu_custom_call.1} parent=1 // loop_body
      %s21 = ssub.s32 %s16, 1
      %s22 = ssub.s32 %s16, 2
      %s23 = sadd.s32 %s16, 1
      %s24 = ssub.s32 %s16, %s23
      %p25 = scmp.eq.s32.totalorder %s24, 0
      %s27 = sadd.s32 %s26, 1
      %s28 = scalar_select %p25, %s26, %s27
      %p31 = pneg %p25
      %p32 = scmp.eq.s32.totalorder %s16, 1
      %p33 = por %p31, %p32
      %p34 = scmp.ne.s32.totalorder %s26, %s29
      %p35 = scmp.eq.s32.totalorder %s16, 0
      %p36 = por %p34, %p35
      %p37 = scmp.ne.s32.totalorder %s26, %s29
      %p38 = scmp.eq.s32.totalorder %s21, 1
      %p39 = por %p37, %p38
      %p40 = scmp.ne.s32.totalorder %s29, %s30
      %p41 = scmp.eq.s32.totalorder %s21, 0
      %p42 = por %p40, %p41
      %p43 = scmp.ne.s32.totalorder %s29, %s30
      %p44 = scmp.eq.s32.totalorder %s22, 1
      %p45 = por %p43, %p44
      %p47 = scmp.ne.s32.totalorder %s30, %s46
      %p48 = scmp.eq.s32.totalorder %s22, 0
      %p49 = por %p47, %p48
      %s51 = sadd.s32 %s50, 1
      %p54 = scmp.eq.s32.totalorder %s16, 1
      %p55 = scmp.ne.s32.totalorder %s50, %s52
      %p56 = scmp.eq.s32.totalorder %s16, 0
      %p57 = por %p55, %p56
      %p58 = scmp.ne.s32.totalorder %s50, %s52
      %p59 = scmp.eq.s32.totalorder %s21, 1
      %p60 = por %p58, %p59
      %p61 = scmp.ne.s32.totalorder %s52, %s53
      %p62 = scmp.eq.s32.totalorder %s21, 0
      %p63 = por %p61, %p62
      %p64 = scmp.ne.s32.totalorder %s52, %s53
      %p65 = scmp.eq.s32.totalorder %s22, 1
      %p66 = por %p64, %p65
      %p68 = scmp.ne.s32.totalorder %s53, %s67
      %p69 = scmp.eq.s32.totalorder %s22, 0
      %p70 = por %p68, %p69
      %s72 = sadd.s32 %s71, 1
      %p75 = scmp.eq.s32.totalorder %s16, 1
      %p76 = scmp.ne.s32.totalorder %s71, %s73
      %p77 = scmp.eq.s32.totalorder %s16, 0
      %p78 = por %p76, %p77
      %p79 = scmp.ne.s32.totalorder %s71, %s73
      %p80 = scmp.eq.s32.totalorder %s21, 1
      %p81 = por %p79, %p80
      %p82 = scmp.ne.s32.totalorder %s73, %s74
      %p83 = scmp.eq.s32.totalorder %s21, 0
      %p84 = por %p82, %p83
      %p85 = scmp.ne.s32.totalorder %s73, %s74
      %p86 = scmp.eq.s32.totalorder %s22, 1
      %p87 = por %p85, %p86
      %p89 = scmp.ne.s32.totalorder %s74, %s88
      %p90 = scmp.eq.s32.totalorder %s22, 0
      %p91 = por %p89, %p90
      %s92 = ssub.s32 %s16, %s23
      %p93 = scmp.eq.s32.totalorder %s92, 0
      %s95 = sadd.s32 %s94, 1
      %s96 = scalar_select %p93, %s94, %s95
      %p99 = pneg %p93
      %p100 = scmp.eq.s32.totalorder %s16, 1
      %p101 = por %p99, %p100
      %p102 = scmp.ne.s32.totalorder %s94, %s97
      %p103 = scmp.eq.s32.totalorder %s16, 0
      %p104 = por %p102, %p103
      %p105 = scmp.ne.s32.totalorder %s94, %s97
      %p106 = scmp.eq.s32.totalorder %s21, 1
      %p107 = por %p105, %p106
      %p108 = scmp.ne.s32.totalorder %s97, %s98
      %p109 = scmp.eq.s32.totalorder %s21, 0
      %p110 = por %p108, %p109
      %p111 = scmp.ne.s32.totalorder %s97, %s98
      %p112 = scmp.eq.s32.totalorder %s22, 1
      %p113 = por %p111, %p112
      %p115 = scmp.ne.s32.totalorder %s98, %s114
      %p116 = scmp.eq.s32.totalorder %s22, 0
      %p117 = por %p115, %p116
      %p118 = scmp.le.s32.totalorder 1, %s16
      %p119 = scmp.lt.s32.totalorder %s16, 3
      %p120 = pnand %p118, %p119
      %p121 = pneg %p120
      // Predicated region
      $region9: #{tpu_custom_call.1} parent=5 // pred_check
        _
      $region10: #{tpu_custom_call.1} parent=5 // pred_check_branch
        %123 = sbr.rel (%p120) target = $region12
      $region11: #{tpu_custom_call.1} parent=5 // pred_region
        %s124 = ssub.s32 %s16, 1
        // Predicated region
        $region13: #{tpu_custom_call.1} parent=11 // pred_check
          %p125 = pneg %p63
        $region14: #{tpu_custom_call.1} parent=11 // pred_check_branch
          %127 = sbr.rel (%p125) target = $region16
        $region15: #{tpu_custom_call.1} parent=11 // pred_region
          %s129 = ssub.s32 512, 512
          %130 = vsyncadd [#allocation6], %s129
          %s131 = sshll.u32 [#allocation5], 4
          %s132 = int_to_ptr.vmem [resolvable:$true] %s131
          %137 = dma.hbm_to_vmem [thread:$0]  %s1, 512, %s132, [#allocation6], 256, 256, 16
        $region16: #{tpu_custom_call.1} parent=11 // pred_fallthru
          _
        // Predicated region
        $region17: #{tpu_custom_call.1} parent=11 // pred_check
          %p138 = pneg %p84
        $region18: #{tpu_custom_call.1} parent=11 // pred_check_branch
          %140 = sbr.rel (%p138) target = $region20
        $region19: #{tpu_custom_call.1} parent=11 // pred_region
          _
        $region20: #{tpu_custom_call.1} parent=11 // pred_fallthru
          _
      $region12: #{tpu_custom_call.1} parent=5 // pred_fallthru
        _
      %p141 = scmp.lt.s32.totalorder %s16, 2
      // Predicated region
      $region21: #{tpu_custom_call.1} parent=5 // pred_check
        %p142 = pneg %p141
      $region22: #{tpu_custom_call.1} parent=5 // pred_check_branch
        %144 = sbr.rel (%p142) target = $region24
      $region23: #{tpu_custom_call.1} parent=5 // pred_region
        // Predicated region
        $region25: #{tpu_custom_call.1} parent=23 // pred_check
          %p145 = pneg %p36
        $region26: #{tpu_custom_call.1} parent=23 // pred_check_branch
          %147 = sbr.rel (%p145) target = $region28
        $region27: #{tpu_custom_call.1} parent=23 // pred_region
          %s148 = sand.u32 %s26, 1
          %s149 = scalar_lea.sflag [#allocation3], %s148
          %s150 = sand.u32 %s26, 1
          %s151 = smul.addr %s150, 32
          %s152 = scalar_lea.vmem [#allocation2], %s151
          %s153 = smul.u32 2, %s16
          %s155 = ssub.s32 512, 512
          %156 = vsyncadd %s149, %s155
          %s157 = smul.addr %s153, 128
          %s158 = scalar_lea.hbm %s0, %s157
          %s159 = sshll.u32 %s152, 4
          %s160 = int_to_ptr.vmem [resolvable:$true] %s159
          %165 = dma.hbm_to_vmem [thread:$0]  %s158, 512, %s160, %s149, 512, 256, 16
        $region28: #{tpu_custom_call.1} parent=23 // pred_fallthru
          _
      $region24: #{tpu_custom_call.1} parent=5 // pred_fallthru
        _
      %p166 = scmp.le.s32.totalorder 1, %s16
      %p167 = scmp.lt.s32.totalorder %s16, 3
      %p168 = pnand %p166, %p167
      %p169 = pneg %p168
      // Predicated region
      $region29: #{tpu_custom_call.1} parent=5 // pred_check
        _
      $region30: #{tpu_custom_call.1} parent=5 // pred_check_branch
        %171 = sbr.rel (%p168) target = $region32
      $region31: #{tpu_custom_call.1} parent=5 // pred_region
        %s172 = ssub.s32 %s16, 1
        %s173 = sand.u32 %s29, 1
        %s174 = scalar_lea.sflag [#allocation3], %s173
        %s175 = sand.u32 %s29, 1
        %s176 = smul.addr %s175, 32
        %s177 = scalar_lea.vmem [#allocation2], %s176
        // Predicated region
        $region33: #{tpu_custom_call.1} parent=31 // pred_check
          %p178 = pneg %p42
        $region34: #{tpu_custom_call.1} parent=31 // pred_check_branch
          %180 = sbr.rel (%p178) target = $region36
        $region35: #{tpu_custom_call.1} parent=31 // pred_region
          %181 = dma.done %s174, 512
        $region36: #{tpu_custom_call.1} parent=31 // pred_fallthru
          _
        // Predicated region
        $region37: #{tpu_custom_call.1} parent=31 // pred_check
          %p182 = pneg %p63
        $region38: #{tpu_custom_call.1} parent=31 // pred_check_branch
          %184 = sbr.rel (%p182) target = $region40
        $region39: #{tpu_custom_call.1} parent=31 // pred_region
          %185 = dma.done [#allocation6], 512
        $region40: #{tpu_custom_call.1} parent=31 // pred_fallthru
          _
        %s186 = sand.u32 %s29, 1
        %s187 = scalar_lea.sflag [#allocation3], %s186
        %s188 = sand.u32 %s29, 1
        %s189 = smul.addr %s188, 32
        %s190 = scalar_lea.vmem [#allocation2], %s189
        %p191 = pneg %p42
        %p192 = pneg %p39
        %p193 = pneg %p63
        %p194 = pneg %p60
        %p195 = pneg %p84
        %p196 = pneg %p81
        %p197 = pneg %p110
        %p198 = pneg %p107
        %s199 = sand.u32 %s97, 1
        %s200 = scalar_lea.sflag [#allocation4], %s199
        %s201 = sand.u32 %s97, 1
        %s202 = smul.addr %s201, 32
        %s203 = scalar_lea.vmem [#allocation7], %s202
        %s204 = smul.u32 2, %s21
        %s205 = smul.u32 2, %s21
        %v206 = vld [vmem:[%s177] sm:$0xff]
        %v207 = vld [vmem:[%s177 + $0x8] sm:$0xff]
        %v208 = vld [vmem:[%s177 + $0x10] sm:$0xff]
        %v209 = vld [vmem:[%s177 + $0x18] sm:$0xff]
        %v210 = vld [vmem:[#allocation5] sm:$0xff]
        %v211 = vld [vmem:[#allocation5 + $0x8] sm:$0xff]
        %v212 = vld [vmem:[#allocation5 + $0x10] sm:$0xff]
        %v213 = vld [vmem:[#allocation5 + $0x18] sm:$0xff]
        %v214 = vld [vmem:[%s2] sm:$0xff]
        %v215 = vld [vmem:[%s2 + $0x8] sm:$0xff]
        %217 = vset.pattern.permute.xlu0 0
        %218 = vperm.xlu0 %217, %v214
        %v219 = vpop.permute.xlu0 %218
        %222 = vset.pattern.permute.xlu0 0
        %223 = vperm.xlu0 %222, %v215
        %v224 = vpop.permute.xlu0 %223
        %v226 = vlaneseq
        %v227 = vand.u32 %v226, 127
        %v228 = vadd.s32 %v227, 128
        %v229 = vand.u32 %v227, 255
        %v230 = vand.u32 %v228, 255
        %v231 = vand.u32 %v229, 15
        %v232 = vand.u32 %v230, 15
        %vm233 = vcmp.ge.s32.totalorder %v229, 16
        %vm234 = vcmp.ge.s32.totalorder %v230, 16
        %vm235 = vcmp.lt.s32.totalorder %v229, 240
        %vm236 = vcmp.lt.s32.totalorder %v230, 240
        %vm237 = vcmp.ge.s32.totalorder %v231, 1
        %vm238 = vcmp.ge.s32.totalorder %v232, 1
        %vm239 = vcmp.le.s32.totalorder %v231, 14
        %vm240 = vcmp.le.s32.totalorder %v232, 14
        %vm241 = vmand %vm233, %vm237
        %vm242 = vmand %vm234, %vm238
        %vm243 = vmand %vm233, %vm239
        %vm244 = vmand %vm234, %vm240
        %vm245 = vmand %vm235, %vm237
        %vm246 = vmand %vm236, %vm238
        %vm247 = vmand %vm235, %vm239
        %vm248 = vmand %vm236, %vm240
        %249 = vrot.lane.b32.xlu0 %v206, 17
        %v250 = vpop.permute.xlu0 %249
        %251 = vrot.lane.b32.xlu0 %v208, 17
        %v252 = vpop.permute.xlu0 %251
        %253 = vrot.lane.b32.xlu0 %v207, 17
        %v254 = vpop.permute.xlu0 %253
        %255 = vrot.lane.b32.xlu0 %v209, 17
        %v256 = vpop.permute.xlu0 %255
        %vm257 = vcmp.lt.s32.totalorder %v227, 17
        %v258 = vsel %vm257, %v250, %v254
        %v259 = vsel %vm257, %v252, %v256
        %v260 = vsel %vm257, %v254, %v250
        %v261 = vsel %vm257, %v256, %v252
        %v262 = vsel %vm241, 1, 0
        %v263 = vsel %vm242, 1, 0
        %vm264 = vcmp.eq.s32.totalorder %v262, 1
        %vm265 = vcmp.eq.s32.totalorder %v263, 1
        %v266 = vsel %vm264, %v260, 0.0
        %v267 = vsel %vm265, %v258, 0.0
        %v268 = vsel %vm264, %v261, 0.0
        %v269 = vsel %vm265, %v259, 0.0
        %270 = vrot.lane.b32.xlu0 %v206, 16
        %v271 = vpop.permute.xlu0 %270
        %272 = vrot.lane.b32.xlu0 %v208, 16
        %v273 = vpop.permute.xlu0 %272
        %274 = vrot.lane.b32.xlu0 %v207, 16
        %v275 = vpop.permute.xlu0 %274
        %276 = vrot.lane.b32.xlu0 %v209, 16
        %v277 = vpop.permute.xlu0 %276
        %vm278 = vcmp.lt.s32.totalorder %v227, 16
        %v279 = vsel %vm278, %v271, %v275
        %v280 = vsel %vm278, %v273, %v277
        %v281 = vsel %vm278, %v275, %v271
        %v282 = vsel %vm278, %v277, %v273
        %v283 = vsel %vm233, 1, 0
        %v284 = vsel %vm234, 1, 0
        %vm285 = vcmp.eq.s32.totalorder %v283, 1
        %vm286 = vcmp.eq.s32.totalorder %v284, 1
        %v287 = vsel %vm285, %v281, 0.0
        %v288 = vsel %vm286, %v279, 0.0
        %v289 = vsel %vm285, %v282, 0.0
        %v290 = vsel %vm286, %v280, 0.0
        %291 = vrot.lane.b32.xlu0 %v206, 15
        %v292 = vpop.permute.xlu0 %291
        %293 = vrot.lane.b32.xlu0 %v208, 15
        %v294 = vpop.permute.xlu0 %293
        %295 = vrot.lane.b32.xlu0 %v207, 15
        %v296 = vpop.permute.xlu0 %295
        %297 = vrot.lane.b32.xlu0 %v209, 15
        %v298 = vpop.permute.xlu0 %297
        %vm299 = vcmp.lt.s32.totalorder %v227, 15
        %v300 = vsel %vm299, %v292, %v296
        %v301 = vsel %vm299, %v294, %v298
        %v302 = vsel %vm299, %v296, %v292
        %v303 = vsel %vm299, %v298, %v294
        %v304 = vsel %vm243, 1, 0
        %v305 = vsel %vm244, 1, 0
        %vm306 = vcmp.eq.s32.totalorder %v304, 1
        %vm307 = vcmp.eq.s32.totalorder %v305, 1
        %v308 = vsel %vm306, %v302, 0.0
        %v309 = vsel %vm307, %v300, 0.0
        %v310 = vsel %vm306, %v303, 0.0
        %v311 = vsel %vm307, %v301, 0.0
        %312 = vrot.lane.b32.xlu0 %v206, 1
        %v313 = vpop.permute.xlu0 %312
        %314 = vrot.lane.b32.xlu0 %v208, 1
        %v315 = vpop.permute.xlu0 %314
        %316 = vrot.lane.b32.xlu0 %v207, 1
        %v317 = vpop.permute.xlu0 %316
        %318 = vrot.lane.b32.xlu0 %v209, 1
        %v319 = vpop.permute.xlu0 %318
        %vm320 = vcmp.lt.s32.totalorder %v227, 1
        %v321 = vsel %vm320, %v313, %v317
        %v322 = vsel %vm320, %v315, %v319
        %v323 = vsel %vm320, %v317, %v313
        %v324 = vsel %vm320, %v319, %v315
        %v325 = vsel %vm237, 1, 0
        %v326 = vsel %vm238, 1, 0
        %vm327 = vcmp.eq.s32.totalorder %v325, 1
        %vm328 = vcmp.eq.s32.totalorder %v326, 1
        %v329 = vsel %vm327, %v323, 0.0
        %v330 = vsel %vm328, %v321, 0.0
        %v331 = vsel %vm327, %v324, 0.0
        %v332 = vsel %vm328, %v322, 0.0
        %333 = vrot.lane.b32.xlu0 %v206, 127
        %v334 = vpop.permute.xlu0 %333
        %335 = vrot.lane.b32.xlu0 %v208, 127
        %v336 = vpop.permute.xlu0 %335
        %337 = vrot.lane.b32.xlu0 %v207, 127
        %v338 = vpop.permute.xlu0 %337
        %339 = vrot.lane.b32.xlu0 %v209, 127
        %v340 = vpop.permute.xlu0 %339
        %vm341 = vcmp.lt.s32.totalorder %v227, 127
        %v342 = vsel %vm341, %v334, %v338
        %v343 = vsel %vm341, %v336, %v340
        %v344 = vsel %vm341, %v338, %v334
        %v345 = vsel %vm341, %v340, %v336
        %v346 = vsel %vm239, 1, 0
        %v347 = vsel %vm240, 1, 0
        %vm348 = vcmp.eq.s32.totalorder %v346, 1
        %vm349 = vcmp.eq.s32.totalorder %v347, 1
        %v350 = vsel %vm348, %v342, 0.0
        %v351 = vsel %vm349, %v344, 0.0
        %v352 = vsel %vm348, %v343, 0.0
        %v353 = vsel %vm349, %v345, 0.0
        %354 = vrot.lane.b32.xlu0 %v206, 113
        %v355 = vpop.permute.xlu0 %354
        %356 = vrot.lane.b32.xlu0 %v208, 113
        %v357 = vpop.permute.xlu0 %356
        %358 = vrot.lane.b32.xlu0 %v207, 113
        %v359 = vpop.permute.xlu0 %358
        %360 = vrot.lane.b32.xlu0 %v209, 113
        %v361 = vpop.permute.xlu0 %360
        %vm362 = vcmp.lt.s32.totalorder %v227, 113
        %v363 = vsel %vm362, %v355, %v359
        %v364 = vsel %vm362, %v357, %v361
        %v365 = vsel %vm362, %v359, %v355
        %v366 = vsel %vm362, %v361, %v357
        %v367 = vsel %vm245, 1, 0
        %v368 = vsel %vm246, 1, 0
        %vm369 = vcmp.eq.s32.totalorder %v367, 1
        %vm370 = vcmp.eq.s32.totalorder %v368, 1
        %v371 = vsel %vm369, %v363, 0.0
        %v372 = vsel %vm370, %v365, 0.0
        %v373 = vsel %vm369, %v364, 0.0
        %v374 = vsel %vm370, %v366, 0.0
        %375 = vrot.lane.b32.xlu0 %v206, 112
        %v376 = vpop.permute.xlu0 %375
        %377 = vrot.lane.b32.xlu0 %v208, 112
        %v378 = vpop.permute.xlu0 %377
        %379 = vrot.lane.b32.xlu0 %v207, 112
        %v380 = vpop.permute.xlu0 %379
        %381 = vrot.lane.b32.xlu0 %v209, 112
        %v382 = vpop.permute.xlu0 %381
        %vm383 = vcmp.lt.s32.totalorder %v227, 112
        %v384 = vsel %vm383, %v376, %v380
        %v385 = vsel %vm383, %v378, %v382
        %v386 = vsel %vm383, %v380, %v376
        %v387 = vsel %vm383, %v382, %v378
        %v388 = vsel %vm235, 1, 0
        %v389 = vsel %vm236, 1, 0
        %vm390 = vcmp.eq.s32.totalorder %v388, 1
        %vm391 = vcmp.eq.s32.totalorder %v389, 1
        %v392 = vsel %vm390, %v384, 0.0
        %v393 = vsel %vm391, %v386, 0.0
        %v394 = vsel %vm390, %v385, 0.0
        %v395 = vsel %vm391, %v387, 0.0
        %396 = vrot.lane.b32.xlu0 %v206, 111
        %v397 = vpop.permute.xlu0 %396
        %398 = vrot.lane.b32.xlu0 %v208, 111
        %v399 = vpop.permute.xlu0 %398
        %400 = vrot.lane.b32.xlu0 %v207, 111
        %v401 = vpop.permute.xlu0 %400
        %402 = vrot.lane.b32.xlu0 %v209, 111
        %v403 = vpop.permute.xlu0 %402
        %vm404 = vcmp.lt.s32.totalorder %v227, 111
        %v405 = vsel %vm404, %v397, %v401
        %v406 = vsel %vm404, %v399, %v403
        %v407 = vsel %vm404, %v401, %v397
        %v408 = vsel %vm404, %v403, %v399
        %v409 = vsel %vm247, 1, 0
        %v410 = vsel %vm248, 1, 0
        %vm411 = vcmp.eq.s32.totalorder %v409, 1
        %vm412 = vcmp.eq.s32.totalorder %v410, 1
        %v413 = vsel %vm411, %v405, 0.0
        %v414 = vsel %vm412, %v407, 0.0
        %v415 = vsel %vm411, %v406, 0.0
        %v416 = vsel %vm412, %v408, 0.0
        %vm417 = vcmask 130048
        %v419 = vsel %vm417, %v211, 0
        %v422 = vsel %vm417, %v213, 0
        %424 = vmatprep.subr.mxu0 %v267
        %425 = vmatpush1.msra.mxu0 %v266
        %426 = vmatprep.subr.mxu0 %v269
        %427 = vmatpush1.msra.mxu0 %v268
        %428 = vmatprep.subr.mxu0 %v288
        %429 = vmatpush1.msra.mxu0 %v287
        %430 = vmatprep.subr.mxu0 %v290
        %431 = vmatpush1.msra.mxu0 %v289
        %432 = vmatprep.subr.mxu0 %v309
        %433 = vmatpush1.msra.mxu0 %v308
        %434 = vmatprep.subr.mxu0 %v311
        %435 = vmatpush1.msra.mxu0 %v310
        %436 = vmatprep.subr.mxu0 %v330
        %437 = vmatpush1.msra.mxu0 %v329
        %438 = vmatprep.subr.mxu0 %v332
        %439 = vmatpush1.msra.mxu0 %v331
        %440 = vmatprep.subr.mxu0 %v207
        %441 = vmatpush1.msra.mxu0 %v206
        %442 = vmatprep.subr.mxu0 %v209
        %443 = vmatpush1.msra.mxu0 %v208
        %444 = vmatprep.subr.mxu0 %v351
        %445 = vmatpush1.msra.mxu0 %v350
        %446 = vmatprep.subr.mxu0 %v353
        %447 = vmatpush1.msra.mxu0 %v352
        %448 = vmatprep.subr.mxu0 %v372
        %449 = vmatpush1.msra.mxu0 %v371
        %450 = vmatprep.subr.mxu0 %v374
        %451 = vmatpush1.msra.mxu0 %v373
        %452 = vmatprep.subr.mxu0 %v393
        %453 = vmatpush1.msra.mxu0 %v392
        %454 = vmatprep.subr.mxu0 %v395
        %455 = vmatpush1.msra.mxu0 %v394
        %456 = vmatprep.subr.mxu0 %v414
        %457 = vmatpush1.msra.mxu0 %v413
        %458 = vmatprep.subr.mxu0 %v416
        %459 = vmatpush1.msra.mxu0 %v415
        %460 = vmatprep.subr.mxu0 0.0
        %461 = vmatpush1.msra.mxu0 0.0
        %462 = vmatprep.subr.mxu0 0.0
        %463 = vmatpush1.msra.mxu0 0.0
        %464 = vmatprep.subr.mxu0 0.0
        %465 = vmatpush1.msra.mxu0 0.0
        %466 = vmatprep.subr.mxu0 0.0
        %467 = vmatpush1.msra.mxu0 0.0
        %468 = vmatprep.subr.mxu0 0.0
        %469 = vmatpush1.msra.mxu0 0.0
        %470 = vmatprep.subr.mxu0 0.0
        %471 = vmatpush1.msra.mxu0 0.0
        %472 = vmatprep.subr.mxu0 0.0
        %473 = vmatpush1.msra.mxu0 0.0
        %474 = vmatprep.subr.mxu0 0.0
        %475 = vmatpush1.msra.mxu0 0.0
        %476 = vmatprep.subr.mxu0 0.0
        %477 = vmatpush1.msra.mxu0 0.0
        %478 = vmatprep.subr.mxu0 0.0
        %479 = vmatpush1.msra.mxu0 0.0
        %480 = vmatprep.subr.mxu0 0.0
        %481 = vmatpush1.msra.mxu0 0.0
        %482 = vmatprep.subr.mxu0 0.0
        %483 = vmatpush1.msra.mxu0 0.0
        %484 = vmatprep.subr.mxu0 0.0
        %485 = vmatpush1.msra.mxu0 0.0
        %486 = vmatprep.subr.mxu0 0.0
        %487 = vmatpush1.msra.mxu0 0.0
        %488 = vmatprep.mubr.f32.mxu0 %v419
        %489 = vmatmul.mubr.f32.gmra.mrb[0].mxu0 %v210
        %v490 = vpop.f32.mrb[0].mxu0
        %v491 = vadd.f32 %v219, %v490
        %v492 = vpop.f32.mrb[0].mxu0
        %v493 = vadd.f32 %v219, %v492
        %494 = vmatprep.mubr.f32.mxu0 %v422
        %495 = vmatmul.mubr.f32.gmra.mrb[0].mxu0 %v212
        %v496 = vpop.f32.mrb[0].mxu0
        %v497 = vadd.f32 %v224, %v496
        %v498 = vpop.f32.mrb[0].mxu0
        %v499 = vadd.f32 %v224, %v498
        %500 = vdwg.mxu0
        %v501 = vmax.f32 %v491, 0.0
        %v502 = vmax.f32 %v493, 0.0
        %v503 = vmax.f32 %v497, 0.0
        %v504 = vmax.f32 %v499, 0.0
        %505 = vrot.lane.b32.xlu0 %v501, 17
        %v506 = vpop.permute.xlu0 %505
        %507 = vrot.lane.b32.xlu0 %v503, 17
        %v508 = vpop.permute.xlu0 %507
        %509 = vrot.lane.b32.xlu0 %v502, 17
        %v510 = vpop.permute.xlu0 %509
        %511 = vrot.lane.b32.xlu0 %v504, 17
        %v512 = vpop.permute.xlu0 %511
        %v513 = vsel %vm257, %v506, %v510
        %v514 = vsel %vm257, %v508, %v512
        %v515 = vsel %vm257, %v510, %v506
        %v516 = vsel %vm257, %v512, %v508
        %v517 = vsel %vm264, %v515, 0.0
        %v518 = vsel %vm265, %v513, 0.0
        %v519 = vsel %vm264, %v516, 0.0
        %v520 = vsel %vm265, %v514, 0.0
        %521 = vrot.lane.b32.xlu0 %v501, 16
        %v522 = vpop.permute.xlu0 %521
        %523 = vrot.lane.b32.xlu0 %v503, 16
        %v524 = vpop.permute.xlu0 %523
        %525 = vrot.lane.b32.xlu0 %v502, 16
        %v526 = vpop.permute.xlu0 %525
        %527 = vrot.lane.b32.xlu0 %v504, 16
        %v528 = vpop.permute.xlu0 %527
        %v529 = vsel %vm278, %v522, %v526
        %v530 = vsel %vm278, %v524, %v528
        %v531 = vsel %vm278, %v526, %v522
        %v532 = vsel %vm278, %v528, %v524
        %v533 = vsel %vm285, %v531, 0.0
        %v534 = vsel %vm286, %v529, 0.0
        %v535 = vsel %vm285, %v532, 0.0
        %v536 = vsel %vm286, %v530, 0.0
        %537 = vrot.lane.b32.xlu0 %v501, 15
        %v538 = vpop.permute.xlu0 %537
        %539 = vrot.lane.b32.xlu0 %v503, 15
        %v540 = vpop.permute.xlu0 %539
        %541 = vrot.lane.b32.xlu0 %v502, 15
        %v542 = vpop.permute.xlu0 %541
        %543 = vrot.lane.b32.xlu0 %v504, 15
        %v544 = vpop.permute.xlu0 %543
        %v545 = vsel %vm299, %v538, %v542
        %v546 = vsel %vm299, %v540, %v544
        %v547 = vsel %vm299, %v542, %v538
        %v548 = vsel %vm299, %v544, %v540
        %v549 = vsel %vm306, %v547, 0.0
        %v550 = vsel %vm307, %v545, 0.0
        %v551 = vsel %vm306, %v548, 0.0
        %v552 = vsel %vm307, %v546, 0.0
        %553 = vrot.lane.b32.xlu0 %v501, 1
        %v554 = vpop.permute.xlu0 %553
        %555 = vrot.lane.b32.xlu0 %v503, 1
        %v556 = vpop.permute.xlu0 %555
        %557 = vrot.lane.b32.xlu0 %v502, 1
        %v558 = vpop.permute.xlu0 %557
        %559 = vrot.lane.b32.xlu0 %v504, 1
        %v560 = vpop.permute.xlu0 %559
        %v561 = vsel %vm320, %v554, %v558
        %v562 = vsel %vm320, %v556, %v560
        %v563 = vsel %vm320, %v558, %v554
        %v564 = vsel %vm320, %v560, %v556
        %v565 = vsel %vm327, %v563, 0.0
        %v566 = vsel %vm328, %v561, 0.0
        %v567 = vsel %vm327, %v564, 0.0
        %v568 = vsel %vm328, %v562, 0.0
        %569 = vrot.lane.b32.xlu0 %v501, 127
        %v570 = vpop.permute.xlu0 %569
        %571 = vrot.lane.b32.xlu0 %v503, 127
        %v572 = vpop.permute.xlu0 %571
        %573 = vrot.lane.b32.xlu0 %v502, 127
        %v574 = vpop.permute.xlu0 %573
        %575 = vrot.lane.b32.xlu0 %v504, 127
        %v576 = vpop.permute.xlu0 %575
        %v577 = vsel %vm341, %v570, %v574
        %v578 = vsel %vm341, %v572, %v576
        %v579 = vsel %vm341, %v574, %v570
        %v580 = vsel %vm341, %v576, %v572
        %v581 = vsel %vm348, %v577, 0.0
        %v582 = vsel %vm349, %v579, 0.0
        %v583 = vsel %vm348, %v578, 0.0
        %v584 = vsel %vm349, %v580, 0.0
        %585 = vrot.lane.b32.xlu0 %v501, 113
        %v586 = vpop.permute.xlu0 %585
        %587 = vrot.lane.b32.xlu0 %v503, 113
        %v588 = vpop.permute.xlu0 %587
        %589 = vrot.lane.b32.xlu0 %v502, 113
        %v590 = vpop.permute.xlu0 %589
        %591 = vrot.lane.b32.xlu0 %v504, 113
        %v592 = vpop.permute.xlu0 %591
        %v593 = vsel %vm362, %v586, %v590
        %v594 = vsel %vm362, %v588, %v592
        %v595 = vsel %vm362, %v590, %v586
        %v596 = vsel %vm362, %v592, %v588
        %v597 = vsel %vm369, %v593, 0.0
        %v598 = vsel %vm370, %v595, 0.0
        %v599 = vsel %vm369, %v594, 0.0
        %v600 = vsel %vm370, %v596, 0.0
        %601 = vrot.lane.b32.xlu0 %v501, 112
        %v602 = vpop.permute.xlu0 %601
        %603 = vrot.lane.b32.xlu0 %v503, 112
        %v604 = vpop.permute.xlu0 %603
        %605 = vrot.lane.b32.xlu0 %v502, 112
        %v606 = vpop.permute.xlu0 %605
        %607 = vrot.lane.b32.xlu0 %v504, 112
        %v608 = vpop.permute.xlu0 %607
        %v609 = vsel %vm383, %v602, %v606
        %v610 = vsel %vm383, %v604, %v608
        %v611 = vsel %vm383, %v606, %v602
        %v612 = vsel %vm383, %v608, %v604
        %v613 = vsel %vm390, %v609, 0.0
        %v614 = vsel %vm391, %v611, 0.0
        %v615 = vsel %vm390, %v610, 0.0
        %v616 = vsel %vm391, %v612, 0.0
        %617 = vrot.lane.b32.xlu0 %v501, 111
        %v618 = vpop.permute.xlu0 %617
        %619 = vrot.lane.b32.xlu0 %v503, 111
        %v620 = vpop.permute.xlu0 %619
        %621 = vrot.lane.b32.xlu0 %v502, 111
        %v622 = vpop.permute.xlu0 %621
        %623 = vrot.lane.b32.xlu0 %v504, 111
        %v624 = vpop.permute.xlu0 %623
        %v625 = vsel %vm404, %v618, %v622
        %v626 = vsel %vm404, %v620, %v624
        %v627 = vsel %vm404, %v622, %v618
        %v628 = vsel %vm404, %v624, %v620
        %v629 = vsel %vm411, %v625, 0.0
        %v630 = vsel %vm412, %v627, 0.0
        %v631 = vsel %vm411, %v626, 0.0
        %v632 = vsel %vm412, %v628, 0.0
        %633 = vmatprep.subr.mxu0 %v518
        %634 = vmatpush1.msra.mxu0 %v517
        %635 = vmatprep.subr.mxu0 %v520
        %636 = vmatpush1.msra.mxu0 %v519
        %637 = vmatprep.subr.mxu0 %v534
        %638 = vmatpush1.msra.mxu0 %v533
        %639 = vmatprep.subr.mxu0 %v536
        %640 = vmatpush1.msra.mxu0 %v535
        %641 = vmatprep.subr.mxu0 %v550
        %642 = vmatpush1.msra.mxu0 %v549
        %643 = vmatprep.subr.mxu0 %v552
        %644 = vmatpush1.msra.mxu0 %v551
        %645 = vmatprep.subr.mxu0 %v566
        %646 = vmatpush1.msra.mxu0 %v565
        %647 = vmatprep.subr.mxu0 %v568
        %648 = vmatpush1.msra.mxu0 %v567
        %649 = vmatprep.subr.mxu0 %v502
        %650 = vmatpush1.msra.mxu0 %v501
        %651 = vmatprep.subr.mxu0 %v504
        %652 = vmatpush1.msra.mxu0 %v503
        %653 = vmatprep.subr.mxu0 %v582
        %654 = vmatpush1.msra.mxu0 %v581
        %655 = vmatprep.subr.mxu0 %v584
        %656 = vmatpush1.msra.mxu0 %v583
        %657 = vmatprep.subr.mxu0 %v598
        %658 = vmatpush1.msra.mxu0 %v597
        %659 = vmatprep.subr.mxu0 %v600
        %660 = vmatpush1.msra.mxu0 %v599
        %661 = vmatprep.subr.mxu0 %v614
        %662 = vmatpush1.msra.mxu0 %v613
        %663 = vmatprep.subr.mxu0 %v616
        %664 = vmatpush1.msra.mxu0 %v615
        %665 = vmatprep.subr.mxu0 %v630
        %666 = vmatpush1.msra.mxu0 %v629
        %667 = vmatprep.subr.mxu0 %v632
        %668 = vmatpush1.msra.mxu0 %v631
        %669 = vmatprep.subr.mxu0 0.0
        %670 = vmatpush1.msra.mxu0 0.0
        %671 = vmatprep.subr.mxu0 0.0
        %672 = vmatpush1.msra.mxu0 0.0
        %673 = vmatprep.subr.mxu0 0.0
        %674 = vmatpush1.msra.mxu0 0.0
        %675 = vmatprep.subr.mxu0 0.0
        %676 = vmatpush1.msra.mxu0 0.0
        %677 = vmatprep.subr.mxu0 0.0
        %678 = vmatpush1.msra.mxu0 0.0
        %679 = vmatprep.subr.mxu0 0.0
        %680 = vmatpush1.msra.mxu0 0.0
        %681 = vmatprep.subr.mxu0 0.0
        %682 = vmatpush1.msra.mxu0 0.0
        %683 = vmatprep.subr.mxu0 0.0
        %684 = vmatpush1.msra.mxu0 0.0
        %685 = vmatprep.subr.mxu0 0.0
        %686 = vmatpush1.msra.mxu0 0.0
        %687 = vmatprep.subr.mxu0 0.0
        %688 = vmatpush1.msra.mxu0 0.0
        %689 = vmatprep.subr.mxu0 0.0
        %690 = vmatpush1.msra.mxu0 0.0
        %691 = vmatprep.subr.mxu0 0.0
        %692 = vmatpush1.msra.mxu0 0.0
        %693 = vmatprep.subr.mxu0 0.0
        %694 = vmatpush1.msra.mxu0 0.0
        %695 = vmatprep.subr.mxu0 0.0
        %696 = vmatpush1.msra.mxu0 0.0
        %697 = vmatprep.mubr.f32.mxu0 %v419
        %698 = vmatmul.mubr.f32.gmra.mrb[0].mxu0 %v210
        %v699 = vpop.f32.mrb[0].mxu0
        %v700 = vadd.f32 %v219, %v699
        %v701 = vpop.f32.mrb[0].mxu0
        %v702 = vadd.f32 %v219, %v701
        %703 = vmatprep.mubr.f32.mxu0 %v422
        %704 = vmatmul.mubr.f32.gmra.mrb[0].mxu0 %v212
        %v705 = vpop.f32.mrb[0].mxu0
        %v706 = vadd.f32 %v224, %v705
        %v707 = vpop.f32.mrb[0].mxu0
        %v708 = vadd.f32 %v224, %v707
        %709 = vdwg.mxu0
        %v710 = vmul.f32 %v700, 0.1
        %v711 = vmul.f32 %v702, 0.1
        %v712 = vmul.f32 %v706, 0.1
        %v713 = vmul.f32 %v708, 0.1
        %v714 = vadd.f32 %v710, %v206
        %v715 = vadd.f32 %v711, %v207
        %v716 = vadd.f32 %v712, %v208
        %v717 = vadd.f32 %v713, %v209
        %718 = vst [vmem:[%s203] sm:$0xff] %v714
        %719 = vst [vmem:[%s203 + $0x8] sm:$0xff] %v715
        %720 = vst [vmem:[%s203 + $0x10] sm:$0xff] %v716
        %721 = vst [vmem:[%s203 + $0x18] sm:$0xff] %v717
        %s722 = sand.u32 %s97, 1
        %s723 = scalar_lea.sflag [#allocation4], %s722
        %s724 = sand.u32 %s97, 1
        %s725 = smul.addr %s724, 32
        %s726 = scalar_lea.vmem [#allocation7], %s725
        // Predicated region
        $region41: #{tpu_custom_call.1} parent=31 // pred_check
          %p727 = pneg %p107
        $region42: #{tpu_custom_call.1} parent=31 // pred_check_branch
          %729 = sbr.rel (%p727) target = $region44
        $region43: #{tpu_custom_call.1} parent=31 // pred_region
          %s730 = smul.u32 2, %s21
          %s732 = ssub.s32 512, 512
          %733 = vsyncadd %s723, %s732
          %s734 = smul.addr %s730, 128
          %s735 = scalar_lea.hbm %s3, %s734
          %s736 = sshll.u32 %s726, 4
          %s737 = int_to_ptr.vmem [resolvable:$true] %s736
          %742 = dma.vmem_to_hbm [thread:$0]  %s737, 512, %s735, %s723, 256, 512, 16
        $region44: #{tpu_custom_call.1} parent=31 // pred_fallthru
          _
      $region32: #{tpu_custom_call.1} parent=5 // pred_fallthru
        _
      %p743 = scmp.le.s32.totalorder 2, %s16
      // Predicated region
      $region45: #{tpu_custom_call.1} parent=5 // pred_check
        %p744 = pneg %p743
      $region46: #{tpu_custom_call.1} parent=5 // pred_check_branch
        %746 = sbr.rel (%p744) target = $region48
      $region47: #{tpu_custom_call.1} parent=5 // pred_region
        %s747 = ssub.s32 %s16, 2
        // Predicated region
        $region49: #{tpu_custom_call.1} parent=47 // pred_check
          %p748 = pneg %p113
        $region50: #{tpu_custom_call.1} parent=47 // pred_check_branch
          %750 = sbr.rel (%p748) target = $region52
        $region51: #{tpu_custom_call.1} parent=47 // pred_region
          %s751 = sand.u32 %s98, 1
          %s752 = scalar_lea.sflag [#allocation4], %s751
          %s753 = sand.u32 %s98, 1
          %s754 = smul.addr %s753, 32
          %s755 = scalar_lea.vmem [#allocation7], %s754
          %756 = dma.done %s752, 512
        $region52: #{tpu_custom_call.1} parent=47 // pred_fallthru
          _
      $region48: #{tpu_custom_call.1} parent=5 // pred_fallthru
        _
    $region6: #{tpu_custom_call.1} parent=1 // loop_footer
      %s20 = sadd.s32 1, %s16
    $region7: #{tpu_custom_call.1} parent=1 // loop_footer_branch
      %15 = sbr.rel target = $region3
    $region8: #{tpu_custom_call.1} parent=1 // loop_exit
      _
    %757 = vsyncpa [#allocation3], 1
    %s758 = scalar_lea.sflag [#allocation3], 1
    %759 = vsyncpa %s758, 1
    %760 = vsyncpa [#allocation6], 1
    %761 = vsyncpa [#allocation4], 1
    %s762 = scalar_lea.sflag [#allocation4], 1
    %763 = vsyncpa %s762, 1

</llo_original>
